<compile_context>
chip_gen: v7x
topology: tpu7x:2x2x1
jax: 0.10.0
libtpu: 0.0.40
codegen_flags: <defaults>
</compile_context>

<pallas_src>
import numpy as np
import jax
import jax.numpy as jnp
from jax.experimental import pallas as pl
from jax.experimental.pallas import tpu as pltpu

# Activation selected by the optuna hyper-parameter conf['activationFunction'];
# all three are implemented, chosen statically at trace time.
ACT = "ReLU"     # one of: "ReLU", "Tanh", "LeakyReLU"

LANES = 128      # TPU lane width
NEG_BIG = -1e30  # bias value for padded logit columns -> exp() underflows to 0


def _act(x):
    if ACT == "Tanh":
        return jnp.tanh(x)
    if ACT == "LeakyReLU":
        return jnp.where(x >= 0.0, x, 0.01 * x)
    return jnp.maximum(x, 0.0)


def _round_up(n, m):
    return ((n + m - 1) // m) * m


# ----------------------------------------------------------------------------
# Pallas kernel: one batch tile per grid step.  One MXU matmul per Linear
# layer (bf16 in, f32 accumulate), VPU activations in f32, EUP exp/reciprocal
# for the softmax.  Weights/biases are two VMEM-resident packed slabs.
# ----------------------------------------------------------------------------
def mlp_kernel(x_ref, w_ref, b_ref, out_ref):
    fp = x_ref.shape[1]       # padded in_features  (rows of w1 segment)
    w = w_ref.shape[1]        # padded hidden/output width (lane dim, mult of 128)

    x = x_ref[...]                                   # (TB, fp) bf16

    # Static carve-out of the packed weight slab (zero-cost ref views).
    w1 = w_ref[0:fp, :]                              # (fp, W) bf16
    w2 = w_ref[fp:fp + w, :]                         # (W,  W) bf16
    w3 = w_ref[fp + w:fp + 2 * w, :]                 # (W,  W) bf16
    b1 = b_ref[0:1, :]                               # (1, W) f32
    b2 = b_ref[1:2, :]
    b3 = b_ref[2:3, :]                               # padded cols hold -1e30

    # lin1 -> act   (dropout is identity in eval mode)
    h = _act(jnp.dot(x, w1, preferred_element_type=jnp.float32) + b1)
    # lin2 -> act   (dropout is identity in eval mode)
    h = _act(jnp.dot(h.astype(jnp.bfloat16), w2,
                     preferred_element_type=jnp.float32) + b2)
    # lin3
    logits = jnp.dot(h.astype(jnp.bfloat16), w3,
                     preferred_element_type=jnp.float32) + b3

    # softmax over dim=-1 (max-subtracted).  Padded columns carry -1e30 bias
    # -> exp underflows to 0, so the normalization only sees the real classes.
    m = jnp.max(logits, axis=-1, keepdims=True)
    e = jnp.exp(logits - m)
    s = jnp.sum(e, axis=-1, keepdims=True)
    out_ref[...] = e * pl.reciprocal(s, approx=False)


# ----------------------------------------------------------------------------
# One-time parameter layout transform: transpose to (in, out), zero-pad every
# dim to a multiple of 128 lanes, coalesce into two packed slabs.
# ----------------------------------------------------------------------------
def prepare_params(params, board_size):
    """Call once at setup, NOT per forward."""
    w1, b1, w2, b2, w3, b3 = [jnp.asarray(p, jnp.float32) for p in params]
    f = board_size * board_size
    n1, n2, n_out = w1.shape[0], w2.shape[0], w3.shape[0]

    fp = _round_up(f, LANES)
    width = max(_round_up(n1, LANES), _round_up(n2, LANES),
                _round_up(n_out, LANES), LANES)

    def pad2(a, rows, cols):
        return jnp.pad(a, ((0, rows - a.shape[0]), (0, cols - a.shape[1])))

    # Weight slab (bf16, MXU inputs): rows = [w1 | w2 | w3]
    w1p = pad2(w1.T, fp, width)          # (fp,    W)
    w2p = pad2(w2.T, width, width)       # (W,     W)
    w3p = pad2(w3.T, width, width)       # (W,     W)
    w_pack = jnp.concatenate([w1p, w2p, w3p], axis=0).astype(jnp.bfloat16)

    # Bias slab (f32): padded lin3 columns get NEG_BIG so softmax ignores them.
    b1p = jnp.pad(b1, (0, width - n1))
    b2p = jnp.pad(b2, (0, width - n2))
    b3p = jnp.pad(b3, (0, width - n_out), constant_values=NEG_BIG)
    b_pack = jnp.stack([b1p, b2p, b3p], axis=0).astype(jnp.float32)   # (3, W)

    return {"w_pack": w_pack, "b_pack": b_pack,
            "f_in": f, "f_pad": fp, "n_out": n_out, "width": width}


# ----------------------------------------------------------------------------
# Wrapper: mirrors MLP_OPTUNA.forward (squeeze, flatten, 3x Linear, act,
# softmax).  Pads the batch to a tile multiple, runs a 1-D grid over batch
# tiles, slices back to the real batch / class count.
# ----------------------------------------------------------------------------
def mlp_optuna_forward(seq, prepared, *, batch_tile=256):
    w_pack, b_pack = prepared["w_pack"], prepared["b_pack"]
    f_in, fp = prepared["f_in"], prepared["f_pad"]
    n_out, width = prepared["n_out"], prepared["width"]

    # np.squeeze(seq); flatten(start_dim=1) if still >2-D else flatten(start_dim=0)
    x = jnp.squeeze(jnp.asarray(seq, jnp.float32))
    if x.ndim > 2:
        x2 = x.reshape(x.shape[0], -1)       # batched: (B, board*board)
        single = False
    else:
        x2 = x.reshape(1, -1)                # single sample: (1, board*board)
        single = True

    b = x2.shape[0]
    tb = min(batch_tile, max(_round_up(b, 16), 16))   # bf16 sublane-friendly tile
    b_pad = _round_up(b, tb)
    n_blocks = b_pad // tb

    # Lane-dense bf16 input slab (padded rows/cols are zeros; sliced away below).
    x_padded = jnp.pad(x2, ((0, b_pad - b), (0, fp - f_in))).astype(jnp.bfloat16)

    cost = pl.CostEstimate(
        flops=2 * b_pad * (fp * width + width * width + width * width),
        transcendentals=b_pad * width,
        bytes_accessed=(x_padded.size * 2 + w_pack.size * 2
                        + b_pack.size * 4 + b_pad * width * 4),
    )

    out = pl.pallas_call(
        mlp_kernel,
        out_shape=jax.ShapeDtypeStruct((b_pad, width), jnp.float32),
        grid=(n_blocks,),
        in_specs=[
            pl.BlockSpec((tb, fp), lambda i: (i, 0)),          # x tiles over batch
            pl.BlockSpec(w_pack.shape, lambda i: (0, 0)),      # weights: VMEM-resident
            pl.BlockSpec(b_pack.shape, lambda i: (0, 0)),      # biases:  VMEM-resident
        ],
        out_specs=pl.BlockSpec((tb, width), lambda i: (i, 0)),
        compiler_params=pltpu.CompilerParams(
            dimension_semantics=("parallel",)),                # v7x: 2 TCs split batch
        cost_estimate=cost,
    )(x_padded, w_pack, b_pack)

    out = out[:b, :n_out]
    return out[0] if single else out


# ----------------------------------------------------------------------------
# Pure-JAX reference (mirrors the PyTorch forward, torch weight layout).
# matmul_dtype lets us check against both the exact-f32 and the bf16-MXU path.
# ----------------------------------------------------------------------------
def reference_forward(seq, params, matmul_dtype=jnp.float32):
    w1, b1, w2, b2, w3, b3 = [jnp.asarray(p, jnp.float32) for p in params]
    x = jnp.squeeze(jnp.asarray(seq, jnp.float32))
    if x.ndim > 2:
        x = x.reshape(x.shape[0], -1)
    else:
        x = x.reshape(-1)

    def lin(h, w, bias):
        return jnp.dot(h.astype(matmul_dtype), w.T.astype(matmul_dtype),
                       preferred_element_type=jnp.float32) + bias

    h = _act(lin(x, w1, b1))                 # dropout == identity in eval mode
    h = _act(lin(h, w2, b2))
    logits = lin(h, w3, b3)
    return jax.nn.softmax(logits, axis=-1)


if __name__ == "__main__":
    key = jax.random.PRNGKey(0)
    ks = jax.random.split(key, 7)

    # conf-equivalent small shapes: board_size=8 -> in_features=64,
    # nodesFirst=128, nodesSec=64, final layer fixed at 64 (as in the module).
    board_size = 8
    nodes_first = 128
    nodes_second = 64
    batch = 2

    w1 = jax.random.normal(ks[0], (nodes_first, board_size * board_size), jnp.float32) * 0.1
    b1 = jax.random.normal(ks[1], (nodes_first,), jnp.float32) * 0.1
    w2 = jax.random.normal(ks[2], (nodes_second, nodes_first), jnp.float32) * 0.1
    b2 = jax.random.normal(ks[3], (nodes_second,), jnp.float32) * 0.1
    w3 = jax.random.normal(ks[4], (64, nodes_second), jnp.float32) * 0.1
    b3 = jax.random.normal(ks[5], (64,), jnp.float32) * 0.1
    params = (w1, b1, w2, b2, w3, b3)

    # Input as the dataloader would supply it: (B, 1, board, board);
    # np.squeeze drops the dummy dim, flatten(start_dim=1) -> (B, 64).
    x = jax.random.normal(ks[6], (batch, 1, board_size, board_size), jnp.float32)

    prepared = prepare_params(params, board_size)     # one-time layout transform
    out = jax.block_until_ready(mlp_optuna_forward(x, prepared))

    # Tight check against a reference that uses the same bf16-MXU / f32-accum path.
    ref_bf16 = jax.block_until_ready(
        reference_forward(x, params, matmul_dtype=jnp.bfloat16))
    # Looser check against the exact f32 torch-style forward (bf16 weight rounding).
    ref_f32 = jax.block_until_ready(
        reference_forward(x, params, matmul_dtype=jnp.float32))

    assert out.shape == (batch, 64)
    assert np.allclose(np.asarray(out), np.asarray(ref_bf16), rtol=5e-3, atol=1e-5), (
        "Pallas kernel output does not match the bf16-matmul JAX reference")
    assert np.allclose(np.asarray(out), np.asarray(ref_f32), rtol=5e-2, atol=1e-3), (
        "Pallas kernel output drifted too far from the exact f32 reference")
    assert np.allclose(np.asarray(out).sum(-1), 1.0, atol=1e-4), (
        "softmax rows do not sum to 1")
    # TODO(synk): nn.Dropout is identity in eval mode; training-mode dropout
    # (pltpu.prng_*) and the train_all/evalulate host loops are not part of the kernel.
    print("KERNEL_OK")
</pallas_src>

<mosaic_0001>
module attributes {stable_mosaic.version = 11 : i64} {
  func.func @mlp_kernel(%arg0: i32, %arg1: memref<16x128xbf16, #tpu.memory_space<vmem>>, %arg2: memref<384x128xbf16, #tpu.memory_space<vmem>>, %arg3: memref<3x128xf32, #tpu.memory_space<vmem>>, %arg4: memref<16x128xf32, #tpu.memory_space<vmem>>) attributes {dimension_semantics = [#tpu.dimension_semantics<parallel>], iteration_bounds = array<i64: 1>, scalar_prefetch = 0 : i64, scratch_operands = 0 : i64, tpu.core_type = #tpu.core_type<tc>, window_params = [{transform_indices = @transform_0, window_bounds = array<i64: 16, 128>}, {pipeline_mode = #tpu.pipeline_mode<synchronous>, transform_indices = @transform_1, window_bounds = array<i64: 384, 128>}, {pipeline_mode = #tpu.pipeline_mode<synchronous>, transform_indices = @transform_2, window_bounds = array<i64: 3, 128>}, {transform_indices = @transform_3, window_bounds = array<i64: 16, 128>}]} {
    %c0 = arith.constant 0 : index
    %c0_0 = arith.constant 0 : index
    %0 = vector.load %arg1[%c0, %c0_0] : memref<16x128xbf16, #tpu.memory_space<vmem>>, vector<16x128xbf16>
    %c0_1 = arith.constant 0 : index
    %c0_2 = arith.constant 0 : index
    %1 = vector.load %arg2[%c0_1, %c0_2] : memref<384x128xbf16, #tpu.memory_space<vmem>>, vector<128x128xbf16>
    %c128 = arith.constant 128 : index
    %c0_3 = arith.constant 0 : index
    %2 = vector.load %arg2[%c128, %c0_3] : memref<384x128xbf16, #tpu.memory_space<vmem>>, vector<128x128xbf16>
    %c256 = arith.constant 256 : index
    %c0_4 = arith.constant 0 : index
    %3 = vector.load %arg2[%c256, %c0_4] : memref<384x128xbf16, #tpu.memory_space<vmem>>, vector<128x128xbf16>
    %c0_5 = arith.constant 0 : index
    %c0_6 = arith.constant 0 : index
    %4 = vector.load %arg3[%c0_5, %c0_6] : memref<3x128xf32, #tpu.memory_space<vmem>>, vector<1x128xf32>
    %c1 = arith.constant 1 : index
    %c0_7 = arith.constant 0 : index
    %5 = vector.load %arg3[%c1, %c0_7] : memref<3x128xf32, #tpu.memory_space<vmem>>, vector<1x128xf32>
    %c2 = arith.constant 2 : index
    %c0_8 = arith.constant 0 : index
    %6 = vector.load %arg3[%c2, %c0_8] : memref<3x128xf32, #tpu.memory_space<vmem>>, vector<1x128xf32>
    %cst = arith.constant dense<0.000000e+00> : vector<16x128xf32>
    %7 = tpu.matmul %0, %1, %cst {dimension_numbers = #tpu.dot_dimension_numbers<[1], [0], [0], [1], [0, 0, 1, 1], [], []>} : vector<16x128xbf16>, vector<128x128xbf16>, vector<16x128xf32> -> vector<16x128xf32>
    %8 = vector.broadcast %4 : vector<1x128xf32> to vector<16x128xf32>
    %9 = arith.addf %7, %8 : vector<16x128xf32>
    %cst_9 = arith.constant 0.000000e+00 : f32
    %10 = vector.broadcast %cst_9 : f32 to vector<16x128xf32>
    %11 = arith.maximumf %9, %10 : vector<16x128xf32>
    %12 = arith.truncf %11 : vector<16x128xf32> to vector<16x128xbf16>
    %cst_10 = arith.constant dense<0.000000e+00> : vector<16x128xf32>
    %13 = tpu.matmul %12, %2, %cst_10 {dimension_numbers = #tpu.dot_dimension_numbers<[1], [0], [0], [1], [0, 0, 1, 1], [], []>} : vector<16x128xbf16>, vector<128x128xbf16>, vector<16x128xf32> -> vector<16x128xf32>
    %14 = vector.broadcast %5 : vector<1x128xf32> to vector<16x128xf32>
    %15 = arith.addf %13, %14 : vector<16x128xf32>
    %cst_11 = arith.constant 0.000000e+00 : f32
    %16 = vector.broadcast %cst_11 : f32 to vector<16x128xf32>
    %17 = arith.maximumf %15, %16 : vector<16x128xf32>
    %18 = arith.truncf %17 : vector<16x128xf32> to vector<16x128xbf16>
    %cst_12 = arith.constant dense<0.000000e+00> : vector<16x128xf32>
    %19 = tpu.matmul %18, %3, %cst_12 {dimension_numbers = #tpu.dot_dimension_numbers<[1], [0], [0], [1], [0, 0, 1, 1], [], []>} : vector<16x128xbf16>, vector<128x128xbf16>, vector<16x128xf32> -> vector<16x128xf32>
    %20 = vector.broadcast %6 : vector<1x128xf32> to vector<16x128xf32>
    %21 = arith.addf %19, %20 : vector<16x128xf32>
    %cst_13 = arith.constant dense<0xFF800000> : vector<16xf32>
    %22 = vector.multi_reduction <maximumf>, %21, %cst_13 [1] : vector<16x128xf32> to vector<16xf32>
    %23 = vector.shape_cast %22 : vector<16xf32> to vector<16x1xf32>
    %24 = vector.broadcast %23 : vector<16x1xf32> to vector<16x128xf32>
    %25 = arith.subf %21, %24 : vector<16x128xf32>
    %26 = math.exp %25 : vector<16x128xf32>
    %cst_14 = arith.constant dense<0.000000e+00> : vector<16xf32>
    %27 = vector.multi_reduction <add>, %26, %cst_14 [1] : vector<16x128xf32> to vector<16xf32>
    %28 = vector.shape_cast %27 : vector<16xf32> to vector<16x1xf32>
    %29 = tpu.reciprocal %28 : vector<16x1xf32> -> vector<16x1xf32>
    %30 = vector.broadcast %29 : vector<16x1xf32> to vector<16x128xf32>
    %31 = arith.mulf %26, %30 : vector<16x128xf32>
    %c0_15 = arith.constant 0 : index
    %c0_16 = arith.constant 0 : index
    %32 = vector.load %arg4[%c0_15, %c0_16] : memref<16x128xf32, #tpu.memory_space<vmem>>, vector<16x128xf32>
    tpu.vector_store %arg4[%c0_15, %c0_16], %31 {strides = array<i32>} : memref<16x128xf32, #tpu.memory_space<vmem>>, vector<16x128xf32>,
    return
  }
  func.func @transform_0(%arg0: i32) -> (i32, i32) {
    %c0_i32 = arith.constant 0 : i32
    %c0_i32_0 = arith.constant 0 : i32
    return %arg0, %c0_i32 : i32, i32
  }
  func.func @transform_1(%arg0: i32) -> (i32, i32) {
    %c0_i32 = arith.constant 0 : i32
    %c0_i32_0 = arith.constant 0 : i32
    %c0_i32_1 = arith.constant 0 : i32
    return %c0_i32, %c0_i32_0 : i32, i32
  }
  func.func @transform_2(%arg0: i32) -> (i32, i32) {
    %c0_i32 = arith.constant 0 : i32
    %c0_i32_0 = arith.constant 0 : i32
    %c0_i32_1 = arith.constant 0 : i32
    return %c0_i32, %c0_i32_0 : i32, i32
  }
  func.func @transform_3(%arg0: i32) -> (i32, i32) {
    %c0_i32 = arith.constant 0 : i32
    %c0_i32_0 = arith.constant 0 : i32
    return %arg0, %c0_i32 : i32, i32
  }
}

</mosaic_0001>

<llo_original>
// kernel: tpu_custom_call.1
$region0: #{tpu_custom_call.1}
  #allocation0 [shape = 'u32[]', space=smem, size = 0x4, offset = 0x4, fixed_abs, tag = 'smem constant byte address 0x4 - core index']
  #allocation1 [shape = 'u32[144,128]{1,0:T(1,128)}', space=vmem, size = 0x12000, scoped, tag = 'internal scratch']
  %s0 = inlined_call_operand.hbm [shape: bf16[16,128], index: 0, kind: input, shape index: {}]
  %s1 = inlined_call_operand.hbm [shape: bf16[384,128], index: 1, kind: input, shape index: {}]
  %s2 = inlined_call_operand.vmem [shape: f32[3,128], index: 2, kind: input, shape index: {}]
  %s3 = inlined_call_operand.hbm [shape: f32[16,128], index: 3, kind: output, shape index: {}]
  %s4 = sld [smem:[#allocation0]]
  $region30: #{tpu_custom_call.1} parent=0
    _
  %s6 = ssub.s32 1, %s4
  %s7 = scalar_select 0, %s6, %s4
  $region1: #{tpu_custom_call.1} parent=0
    #allocation2 [shape = 'u8[4096]{0}', space=vmem, size = 0x1000, scoped, tag = 'input window, operand 0, single buffered']
    #allocation3 [shape = 's32[1]{0}', space=sflag, size = 0x4, scoped, tag = 'scoped memory for tpu_custom_call.1']
    #allocation4 [shape = 's32[1]{0}', space=sflag, size = 0x4, scoped, tag = 'scoped memory for tpu_custom_call.1']
    #allocation5 [shape = 'u8[98304]{0}', space=vmem, size = 0x18000, scoped, tag = 'input window, operand 1, single buffered']
    #allocation6 [shape = 's32[1]{0}', space=sflag, size = 0x4, scoped, tag = 'scoped memory for tpu_custom_call.1']
    #allocation7 [shape = 'u8[8192]{0}', space=vmem, size = 0x2000, scoped, tag = 'output window, operand 0, single buffered']
    %8 = vsyncpa [#allocation3], 0
    %9 = vsyncpa [#allocation6], 0
    %10 = vsyncpa [#allocation4], 0
    // Predicated region
    $region2: #{tpu_custom_call.1} parent=1 // pred_check
      _
    $region3: #{tpu_custom_call.1} parent=1 // pred_check_branch
      %12 = sbr.rel (0) target = $region5
    $region4: #{tpu_custom_call.1} parent=1 // pred_region
      %s14 = ssub.s32 128, 128
      %15 = vsyncadd [#allocation3], %s14
      %s16 = sshll.u32 [#allocation2], 4
      %s17 = int_to_ptr.vmem [resolvable:$true] %s16
      %22 = dma.hbm_to_vmem [thread:$0]  %s0, 128, %s17, [#allocation3], 64, 64, 4
    $region5: #{tpu_custom_call.1} parent=1 // pred_fallthru
      _
    // Predicated region
    $region6: #{tpu_custom_call.1} parent=1 // pred_check
      _
    $region7: #{tpu_custom_call.1} parent=1 // pred_check_branch
      %24 = sbr.rel (0) target = $region9
    $region8: #{tpu_custom_call.1} parent=1 // pred_region
      %s26 = ssub.s32 3072, 3072
      %27 = vsyncadd [#allocation6], %s26
      %s28 = sshll.u32 [#allocation5], 4
      %s29 = int_to_ptr.vmem [resolvable:$true] %s28
      %34 = dma.hbm_to_vmem [thread:$0]  %s1, 3072, %s29, [#allocation6], 64, 64, 4
    $region9: #{tpu_custom_call.1} parent=1 // pred_fallthru
      _
    // Predicated region
    $region10: #{tpu_custom_call.1} parent=1 // pred_check
      _
    $region11: #{tpu_custom_call.1} parent=1 // pred_check_branch
      %36 = sbr.rel (0) target = $region13
    $region12: #{tpu_custom_call.1} parent=1 // pred_region
      _
    $region13: #{tpu_custom_call.1} parent=1 // pred_fallthru
      _
    // Predicated region
    $region14: #{tpu_custom_call.1} parent=1 // pred_check
      _
    $region15: #{tpu_custom_call.1} parent=1 // pred_check_branch
      %38 = sbr.rel (0) target = $region17
    $region16: #{tpu_custom_call.1} parent=1 // pred_region
      %39 = dma.done [#allocation3], 128
    $region17: #{tpu_custom_call.1} parent=1 // pred_fallthru
      _
    // Predicated region
    $region18: #{tpu_custom_call.1} parent=1 // pred_check
      _
    $region19: #{tpu_custom_call.1} parent=1 // pred_check_branch
      %41 = sbr.rel (0) target = $region21
    $region20: #{tpu_custom_call.1} parent=1 // pred_region
      %42 = dma.done [#allocation6], 3072
    $region21: #{tpu_custom_call.1} parent=1 // pred_fallthru
      _
    %v44 = vld [vmem:[#allocation2] sm:$0xf]
    %v45 = vld [vmem:[#allocation2 + $0x4] sm:$0xf]
    %v46 = vld [vmem:[#allocation5] sm:$0xf]
    %v47 = vld [vmem:[#allocation5 + $0x4] sm:$0xf]
    %v48 = vld [vmem:[#allocation5 + $0x8] sm:$0xf]
    %v49 = vld [vmem:[#allocation5 + $0xc] sm:$0xf]
    %v50 = vld [vmem:[#allocation5 + $0x10] sm:$0xf]
    %v51 = vld [vmem:[#allocation5 + $0x14] sm:$0xf]
    %v52 = vld [vmem:[#allocation5 + $0x18] sm:$0xf]
    %v53 = vld [vmem:[#allocation5 + $0x1c] sm:$0xf]
    %v54 = vld [vmem:[#allocation5 + $0x20] sm:$0xf]
    %v55 = vld [vmem:[#allocation5 + $0x24] sm:$0xf]
    %v56 = vld [vmem:[#allocation5 + $0x28] sm:$0xf]
    %v57 = vld [vmem:[#allocation5 + $0x2c] sm:$0xf]
    %v58 = vld [vmem:[#allocation5 + $0x30] sm:$0xf]
    %v59 = vld [vmem:[#allocation5 + $0x34] sm:$0xf]
    %v60 = vld [vmem:[#allocation5 + $0x38] sm:$0xf]
    %v61 = vld [vmem:[#allocation5 + $0x3c] sm:$0xf]
    %v62 = vld [vmem:[#allocation5 + $0x40] sm:$0xf]
    %v63 = vld [vmem:[#allocation5 + $0x44] sm:$0xf]
    %v64 = vld [vmem:[#allocation5 + $0x48] sm:$0xf]
    %v65 = vld [vmem:[#allocation5 + $0x4c] sm:$0xf]
    %v66 = vld [vmem:[#allocation5 + $0x50] sm:$0xf]
    %v67 = vld [vmem:[#allocation5 + $0x54] sm:$0xf]
    %v68 = vld [vmem:[#allocation5 + $0x58] sm:$0xf]
    %v69 = vld [vmem:[#allocation5 + $0x5c] sm:$0xf]
    %v70 = vld [vmem:[#allocation5 + $0x60] sm:$0xf]
    %v71 = vld [vmem:[#allocation5 + $0x64] sm:$0xf]
    %v72 = vld [vmem:[#allocation5 + $0x68] sm:$0xf]
    %v73 = vld [vmem:[#allocation5 + $0x6c] sm:$0xf]
    %v74 = vld [vmem:[#allocation5 + $0x70] sm:$0xf]
    %v75 = vld [vmem:[#allocation5 + $0x74] sm:$0xf]
    %v76 = vld [vmem:[#allocation5 + $0x78] sm:$0xf]
    %v77 = vld [vmem:[#allocation5 + $0x7c] sm:$0xf]
    %v78 = vld [vmem:[#allocation5 + $0x80] sm:$0xf]
    %v79 = vld [vmem:[#allocation5 + $0x84] sm:$0xf]
    %v80 = vld [vmem:[#allocation5 + $0x88] sm:$0xf]
    %v81 = vld [vmem:[#allocation5 + $0x8c] sm:$0xf]
    %v82 = vld [vmem:[#allocation5 + $0x90] sm:$0xf]
    %v83 = vld [vmem:[#allocation5 + $0x94] sm:$0xf]
    %v84 = vld [vmem:[#allocation5 + $0x98] sm:$0xf]
    %v85 = vld [vmem:[#allocation5 + $0x9c] sm:$0xf]
    %v86 = vld [vmem:[#allocation5 + $0xa0] sm:$0xf]
    %v87 = vld [vmem:[#allocation5 + $0xa4] sm:$0xf]
    %v88 = vld [vmem:[#allocation5 + $0xa8] sm:$0xf]
    %v89 = vld [vmem:[#allocation5 + $0xac] sm:$0xf]
    %v90 = vld [vmem:[#allocation5 + $0xb0] sm:$0xf]
    %v91 = vld [vmem:[#allocation5 + $0xb4] sm:$0xf]
    %v92 = vld [vmem:[#allocation5 + $0xb8] sm:$0xf]
    %v93 = vld [vmem:[#allocation5 + $0xbc] sm:$0xf]
    %v94 = vld [vmem:[%s2] sm:$0x1]
    %v95 = vld [vmem:[%s2 + $0x1] sm:$0x1]
    %v96 = vld [vmem:[%s2 + $0x2] sm:$0x1]
    %v97 = vlaneseq
    %v98 = vshrl.u32 %v97, 7
    %v99 = vsub.s32 0, %v98
    %v100 = vrot.slane %v94, %v99
    %v103 = vunpack.c.l.b16 %v44
    %v104 = vunpack.c.l.b16 %v45
    %v105 = vpack.c.b16 %v104, %v103
    %v123 = vunpack.c.l.b16 %v46
    %v124 = vunpack.c.l.b16 %v47
    %v125 = vunpack.c.l.b16 %v48
    %v126 = vunpack.c.l.b16 %v49
    %v127 = vunpack.c.l.b16 %v50
    %v128 = vunpack.c.l.b16 %v51
    %v129 = vunpack.c.l.b16 %v52
    %v130 = vunpack.c.l.b16 %v53
    %v131 = vunpack.c.l.b16 %v54
    %v132 = vunpack.c.l.b16 %v55
    %v133 = vunpack.c.l.b16 %v56
    %v134 = vunpack.c.l.b16 %v57
    %v135 = vunpack.c.l.b16 %v58
    %v136 = vunpack.c.l.b16 %v59
    %v137 = vunpack.c.l.b16 %v60
    %v138 = vunpack.c.l.b16 %v61
    %v139 = vpack.c.b16 %v124, %v123
    %v140 = vpack.c.b16 %v126, %v125
    %v141 = vpack.c.b16 %v128, %v127
    %v142 = vpack.c.b16 %v130, %v129
    %v143 = vpack.c.b16 %v132, %v131
    %v144 = vpack.c.b16 %v134, %v133
    %v145 = vpack.c.b16 %v136, %v135
    %v146 = vpack.c.b16 %v138, %v137
    %155 = vmatprep.subr.bf16.mxu0 0
    %156 = vmatpush1.bf16.msra.mxu0 %v139
    %157 = vmatprep.subr.bf16.mxu0 0
    %158 = vmatpush1.bf16.msra.mxu0 %v140
    %159 = vmatprep.subr.bf16.mxu0 0
    %160 = vmatpush1.bf16.msra.mxu0 %v141
    %161 = vmatprep.subr.bf16.mxu0 0
    %162 = vmatpush1.bf16.msra.mxu0 %v142
    %163 = vmatprep.subr.bf16.mxu0 0
    %164 = vmatpush1.bf16.msra.mxu0 %v143
    %165 = vmatprep.subr.bf16.mxu0 0
    %166 = vmatpush1.bf16.msra.mxu0 %v144
    %167 = vmatprep.subr.bf16.mxu0 0
    %168 = vmatpush1.bf16.msra.mxu0 %v145
    %169 = vmatprep.subr.bf16.mxu0 0
    %170 = vmatpush1.bf16.msra.mxu0 %v146
    %171 = vmatprep.subr.bf16.mxu0 0
    %172 = vmatpush1.bf16.msra.mxu0 0
    %173 = vmatprep.subr.bf16.mxu0 0
    %174 = vmatpush1.bf16.msra.mxu0 0
    %175 = vmatprep.subr.bf16.mxu0 0
    %176 = vmatpush1.bf16.msra.mxu0 0
    %177 = vmatprep.subr.bf16.mxu0 0
    %178 = vmatpush1.bf16.msra.mxu0 0
    %179 = vmatprep.subr.bf16.mxu0 0
    %180 = vmatpush1.bf16.msra.mxu0 0
    %181 = vmatprep.subr.bf16.mxu0 0
    %182 = vmatpush1.bf16.msra.mxu0 0
    %183 = vmatprep.subr.bf16.mxu0 0
    %184 = vmatpush1.bf16.msra.mxu0 0
    %185 = vmatprep.subr.bf16.mxu0 0
    %186 = vmatpush1.bf16.msra.mxu0 0
    %187 = vmatprep.mubr.bf16.mxu0 0
    %188 = vmatmul.mubr.bf16.gmra.mrb[0].mxu0 %v105
    %v189 = vpop.f32.mrb[0].mxu0
    %v190 = vadd.f32 %v100, %v189
    %v191 = vpop.f32.mrb[0].mxu0
    %v192 = vpop.f32.mrb[0].mxu0
    %v193 = vadd.f32 %v100, %v192
    %v194 = vpop.f32.mrb[0].mxu0
    %195 = vdwg.mxu0
    %v196 = vmax.f32 %v190, 0.0
    %v197 = vmax.f32 %v193, 0.0
    %v198 = vpack.c.bf16 %v197, %v196
    %v199 = vlaneseq
    %v200 = vshrl.u32 %v199, 7
    %v201 = vsub.s32 0, %v200
    %v202 = vrot.slane %v95, %v201
    %v219 = vunpack.c.l.b16 %v62
    %v220 = vunpack.c.l.b16 %v63
    %v221 = vunpack.c.l.b16 %v64
    %v222 = vunpack.c.l.b16 %v65
    %v223 = vunpack.c.l.b16 %v66
    %v224 = vunpack.c.l.b16 %v67
    %v225 = vunpack.c.l.b16 %v68
    %v226 = vunpack.c.l.b16 %v69
    %v227 = vunpack.c.l.b16 %v70
    %v228 = vunpack.c.l.b16 %v71
    %v229 = vunpack.c.l.b16 %v72
    %v230 = vunpack.c.l.b16 %v73
    %v231 = vunpack.c.l.b16 %v74
    %v232 = vunpack.c.l.b16 %v75
    %v233 = vunpack.c.l.b16 %v76
    %v234 = vunpack.c.l.b16 %v77
    %v235 = vpack.c.b16 %v220, %v219
    %v236 = vpack.c.b16 %v222, %v221
    %v237 = vpack.c.b16 %v224, %v223
    %v238 = vpack.c.b16 %v226, %v225
    %v239 = vpack.c.b16 %v228, %v227
    %v240 = vpack.c.b16 %v230, %v229
    %v241 = vpack.c.b16 %v232, %v231
    %v242 = vpack.c.b16 %v234, %v233
    %251 = vmatprep.subr.bf16.mxu0 0
    %252 = vmatpush1.bf16.msra.mxu0 %v235
    %253 = vmatprep.subr.bf16.mxu0 0
    %254 = vmatpush1.bf16.msra.mxu0 %v236
    %255 = vmatprep.subr.bf16.mxu0 0
    %256 = vmatpush1.bf16.msra.mxu0 %v237
    %257 = vmatprep.subr.bf16.mxu0 0
    %258 = vmatpush1.bf16.msra.mxu0 %v238
    %259 = vmatprep.subr.bf16.mxu0 0
    %260 = vmatpush1.bf16.msra.mxu0 %v239
    %261 = vmatprep.subr.bf16.mxu0 0
    %262 = vmatpush1.bf16.msra.mxu0 %v240
    %263 = vmatprep.subr.bf16.mxu0 0
    %264 = vmatpush1.bf16.msra.mxu0 %v241
    %265 = vmatprep.subr.bf16.mxu0 0
    %266 = vmatpush1.bf16.msra.mxu0 %v242
    %267 = vmatprep.subr.bf16.mxu0 0
    %268 = vmatpush1.bf16.msra.mxu0 0
    %269 = vmatprep.subr.bf16.mxu0 0
    %270 = vmatpush1.bf16.msra.mxu0 0
    %271 = vmatprep.subr.bf16.mxu0 0
    %272 = vmatpush1.bf16.msra.mxu0 0
    %273 = vmatprep.subr.bf16.mxu0 0
    %274 = vmatpush1.bf16.msra.mxu0 0
    %275 = vmatprep.subr.bf16.mxu0 0
    %276 = vmatpush1.bf16.msra.mxu0 0
    %277 = vmatprep.subr.bf16.mxu0 0
    %278 = vmatpush1.bf16.msra.mxu0 0
    %279 = vmatprep.subr.bf16.mxu0 0
    %280 = vmatpush1.bf16.msra.mxu0 0
    %281 = vmatprep.subr.bf16.mxu0 0
    %282 = vmatpush1.bf16.msra.mxu0 0
    %283 = vmatprep.mubr.bf16.mxu0 0
    %284 = vmatmul.mubr.bf16.gmra.mrb[0].mxu0 %v198
    %v285 = vpop.f32.mrb[0].mxu0
    %v286 = vadd.f32 %v202, %v285
    %v287 = vpop.f32.mrb[0].mxu0
    %v288 = vpop.f32.mrb[0].mxu0
    %v289 = vadd.f32 %v202, %v288
    %v290 = vpop.f32.mrb[0].mxu0
    %291 = vdwg.mxu0
    %v292 = vmax.f32 %v286, 0.0
    %v293 = vmax.f32 %v289, 0.0
    %v294 = vpack.c.bf16 %v293, %v292
    %v295 = vlaneseq
    %v296 = vshrl.u32 %v295, 7
    %v297 = vsub.s32 0, %v296
    %v298 = vrot.slane %v96, %v297
    %v315 = vunpack.c.l.b16 %v78
    %v316 = vunpack.c.l.b16 %v79
    %v317 = vunpack.c.l.b16 %v80
    %v318 = vunpack.c.l.b16 %v81
    %v319 = vunpack.c.l.b16 %v82
    %v320 = vunpack.c.l.b16 %v83
    %v321 = vunpack.c.l.b16 %v84
    %v322 = vunpack.c.l.b16 %v85
    %v323 = vunpack.c.l.b16 %v86
    %v324 = vunpack.c.l.b16 %v87
    %v325 = vunpack.c.l.b16 %v88
    %v326 = vunpack.c.l.b16 %v89
    %v327 = vunpack.c.l.b16 %v90
    %v328 = vunpack.c.l.b16 %v91
    %v329 = vunpack.c.l.b16 %v92
    %v330 = vunpack.c.l.b16 %v93
    %v331 = vpack.c.b16 %v316, %v315
    %v332 = vpack.c.b16 %v318, %v317
    %v333 = vpack.c.b16 %v320, %v319
    %v334 = vpack.c.b16 %v322, %v321
    %v335 = vpack.c.b16 %v324, %v323
    %v336 = vpack.c.b16 %v326, %v325
    %v337 = vpack.c.b16 %v328, %v327
    %v338 = vpack.c.b16 %v330, %v329
    %347 = vmatprep.subr.bf16.mxu0 0
    %348 = vmatpush1.bf16.msra.mxu0 %v331
    %349 = vmatprep.subr.bf16.mxu0 0
    %350 = vmatpush1.bf16.msra.mxu0 %v332
    %351 = vmatprep.subr.bf16.mxu0 0
    %352 = vmatpush1.bf16.msra.mxu0 %v333
    %353 = vmatprep.subr.bf16.mxu0 0
    %354 = vmatpush1.bf16.msra.mxu0 %v334
    %355 = vmatprep.subr.bf16.mxu0 0
    %356 = vmatpush1.bf16.msra.mxu0 %v335
    %357 = vmatprep.subr.bf16.mxu0 0
    %358 = vmatpush1.bf16.msra.mxu0 %v336
    %359 = vmatprep.subr.bf16.mxu0 0
    %360 = vmatpush1.bf16.msra.mxu0 %v337
    %361 = vmatprep.subr.bf16.mxu0 0
    %362 = vmatpush1.bf16.msra.mxu0 %v338
    %363 = vmatprep.subr.bf16.mxu0 0
    %364 = vmatpush1.bf16.msra.mxu0 0
    %365 = vmatprep.subr.bf16.mxu0 0
    %366 = vmatpush1.bf16.msra.mxu0 0
    %367 = vmatprep.subr.bf16.mxu0 0
    %368 = vmatpush1.bf16.msra.mxu0 0
    %369 = vmatprep.subr.bf16.mxu0 0
    %370 = vmatpush1.bf16.msra.mxu0 0
    %371 = vmatprep.subr.bf16.mxu0 0
    %372 = vmatpush1.bf16.msra.mxu0 0
    %373 = vmatprep.subr.bf16.mxu0 0
    %374 = vmatpush1.bf16.msra.mxu0 0
    %375 = vmatprep.subr.bf16.mxu0 0
    %376 = vmatpush1.bf16.msra.mxu0 0
    %377 = vmatprep.subr.bf16.mxu0 0
    %378 = vmatpush1.bf16.msra.mxu0 0
    %379 = vmatprep.mubr.bf16.mxu0 0
    %380 = vmatmul.mubr.bf16.gmra.mrb[0].mxu0 %v294
    %v381 = vpop.f32.mrb[0].mxu0
    %v382 = vadd.f32 %v298, %v381
    %v383 = vpop.f32.mrb[0].mxu0
    %v384 = vpop.f32.mrb[0].mxu0
    %v385 = vadd.f32 %v298, %v384
    %v386 = vpop.f32.mrb[0].mxu0
    %387 = vdwg.mxu0
    %388 = vmax.xlane.f32.xlu0 %v382
    %v389 = vpop.xlane.xlu0 %388
    %390 = vmax.xlane.f32.xlu0 %v385
    %v391 = vpop.xlane.xlu0 %390
    %v392 = vsub.f32 %v382, %v389
    %v393 = vsub.f32 %v385, %v391
    %v394 = vmul.f32 %v392, 1.442695
    %v395 = vpow.pop %v394
    %v396 = vmul.f32 %v393, 1.442695
    %v397 = vpow.pop %v396
    %398 = vadd.xlane.f32.xlu0 %v395
    %v399 = vpop.xlane.xlu0 %398
    %400 = vadd.xlane.f32.xlu0 %v397
    %v401 = vpop.xlane.xlu0 %400
    %v402 = vrcp.pop %v399
    %v403 = vrcp.pop %v401
    %v404 = vmul.f32 %v395, %v402
    %v405 = vmul.f32 %v397, %v403
    %406 = vst [vmem:[#allocation7] sm:$0xff] %v404
    %407 = vst [vmem:[#allocation7 + $0x8] sm:$0xff] %v405
    // Predicated region
    $region22: #{tpu_custom_call.1} parent=1 // pred_check
      _
    $region23: #{tpu_custom_call.1} parent=1 // pred_check_branch
      %409 = sbr.rel (0) target = $region25
    $region24: #{tpu_custom_call.1} parent=1 // pred_region
      %s411 = ssub.s32 256, 256
      %412 = vsyncadd [#allocation4], %s411
      %s413 = sshll.u32 [#allocation7], 4
      %s414 = int_to_ptr.vmem [resolvable:$true] %s413
      %419 = dma.vmem_to_hbm [thread:$0]  %s414, 256, %s3, [#allocation4], 128, 128, 8
    $region25: #{tpu_custom_call.1} parent=1 // pred_fallthru
      _
    // Predicated region
    $region26: #{tpu_custom_call.1} parent=1 // pred_check
      _
    $region27: #{tpu_custom_call.1} parent=1 // pred_check_branch
      %421 = sbr.rel (0) target = $region29
    $region28: #{tpu_custom_call.1} parent=1 // pred_region
      %422 = dma.done [#allocation4], 256
    $region29: #{tpu_custom_call.1} parent=1 // pred_fallthru
      _
    %423 = vsyncpa [#allocation3], 1
    %424 = vsyncpa [#allocation6], 1
    %425 = vsyncpa [#allocation4], 1

</llo_original>
